<compile_context>
chip_gen: v5e
topology: v5e:2x2
jax: 0.10.0
libtpu: 0.0.40
codegen_flags: <defaults>
</compile_context>

<pallas_src>
import math
import jax
import jax.numpy as jnp
from jax.experimental import pallas as pl
from jax.experimental.pallas import tpu as pltpu

# ---- small module hyperparameters (consistent with the nn.Module, scaled down) ----
B = 8                      # batch (multiple of 8 -> full f32 sublane group)
CLIP_DIM = 32              # clip_embeddings_dim
CROSS_DIM = 32             # cross_attention_dim (D)
TOKENS = 4                 # clip_extra_context_tokens (T)
OUT_DIM = TOKENS * CROSS_DIM   # 128 -> lane-dense
EPS = 1e-5                 # nn.LayerNorm default

_HI = jax.lax.Precision.HIGHEST


def image_proj_kernel(x_ref, wcat_ref, aux_ref, seg_ref, out_ref):
    # x:    (B, CLIP_DIM)
    # wcat: (CLIP_DIM, 2*OUT_DIM)   = [ W | W @ seg ]   (projection and folded per-token mean)
    # aux:  (2, 2*OUT_DIM)          row0 = [bias | bias @ seg], row1 = [gamma tiled | beta tiled]
    # seg:  (OUT_DIM, OUT_DIM) bf16 block-diagonal averaging matrix (1/D within a token block)
    x = x_ref[...].astype(jnp.float32)     # mirrors image_embeds.type(proj.weight.dtype)

    # Single MXU op produces the projection p and its per-token mean mu side by side.
    pm = jnp.dot(x, wcat_ref[...], precision=_HI,
                 preferred_element_type=jnp.float32) + aux_ref[0:1, :]
    p = pm[:, :OUT_DIM]                    # (B, OUT_DIM) lane-aligned slice
    mu = pm[:, OUT_DIM:]                   # per-token mean, already broadcast across D lanes
    c = p - mu

    # Per-token variance via one segment-mean matmul (seg entries are bf16-exact).
    seg = seg_ref[...].astype(jnp.float32)
    var = jnp.dot(c * c, seg, precision=_HI, preferred_element_type=jnp.float32)

    y = c * jax.lax.rsqrt(var + EPS)

    gamma = aux_ref[1:2, :OUT_DIM]
    beta = aux_ref[1:2, OUT_DIM:]
    out_ref[...] = y * gamma + beta        # single lane-dense (B, OUT_DIM) store


def make_image_proj(w, bias, gamma, beta):
    """Precompute folded constants ONCE and return a jitted forward closed over them."""
    w = w.astype(jnp.float32)
    bias = bias.astype(jnp.float32)

    # Block-diagonal per-token averaging matrix: seg[i, j] = 1/D iff i, j in same token block.
    seg_f32 = jnp.kron(
        jnp.eye(TOKENS, dtype=jnp.float32),
        jnp.full((CROSS_DIM, CROSS_DIM), 1.0 / CROSS_DIM, jnp.float32),
    )
    # Fold the mean reduction into the projection weights.
    w_mu = jnp.dot(w, seg_f32, precision=_HI)
    b_mu = jnp.dot(bias, seg_f32, precision=_HI)
    w_cat = jnp.concatenate([w, w_mu], axis=1)                       # (CLIP_DIM, 2*OUT_DIM)
    aux = jnp.stack(
        [jnp.concatenate([bias, b_mu]),
         jnp.concatenate([jnp.tile(gamma, TOKENS), jnp.tile(beta, TOKENS)])],
        axis=0,
    ).astype(jnp.float32)                                            # (2, 2*OUT_DIM)
    seg_bf16 = seg_f32.astype(jnp.bfloat16)                          # 0 and 1/32 are bf16-exact

    TB = 8  # batch tile

    @jax.jit
    def run(image_embeds):
        b = image_embeds.shape[0]
        tb = TB if (b % TB == 0) else b
        n_blocks = b // tb
        out_shape = jax.ShapeDtypeStruct((b, OUT_DIM), jnp.float32)

        if n_blocks == 1:
            # Whole problem resident in VMEM; no grid / no pipeline scaffolding.
            vmem = pl.BlockSpec(memory_space=pltpu.MemorySpace.VMEM)
            flat = pl.pallas_call(
                image_proj_kernel,
                out_shape=out_shape,
                in_specs=[vmem, vmem, vmem, vmem],
                out_specs=vmem,
            )(image_embeds, w_cat, aux, seg_bf16)
        else:
            # Large batch: 1-D parallel grid over batch blocks (uses both TCs on v7x).
            flat = pl.pallas_call(
                image_proj_kernel,
                out_shape=out_shape,
                grid=(n_blocks,),
                in_specs=[
                    pl.BlockSpec((tb, CLIP_DIM), lambda i: (i, 0)),
                    pl.BlockSpec((CLIP_DIM, 2 * OUT_DIM), lambda i: (0, 0)),
                    pl.BlockSpec((2, 2 * OUT_DIM), lambda i: (0, 0)),
                    pl.BlockSpec((OUT_DIM, OUT_DIM), lambda i: (0, 0)),
                ],
                out_specs=pl.BlockSpec((tb, OUT_DIM), lambda i: (i, 0)),
                compiler_params=pltpu.CompilerParams(
                    dimension_semantics=("parallel",)),
            )(image_embeds, w_cat, aux, seg_bf16)

        # wrapper-side reshape == the .reshape(-1, T, D) in the PyTorch forward
        return flat.reshape(b, TOKENS, CROSS_DIM)

    return run


def reference(image_embeds, w, bias, gamma, beta):
    # pure-JAX mirror of the PyTorch forward
    p = jnp.dot(image_embeds.astype(jnp.float32), w, precision=_HI) + bias
    t = p.reshape(-1, TOKENS, CROSS_DIM)
    mu = jnp.mean(t, axis=-1, keepdims=True)
    var = jnp.mean((t - mu) ** 2, axis=-1, keepdims=True)
    return (t - mu) / jnp.sqrt(var + EPS) * gamma + beta


if __name__ == "__main__":
    key = jax.random.PRNGKey(0)
    kx, kw, kb, kg, kbt = jax.random.split(key, 5)

    image_embeds = jax.random.normal(kx, (B, CLIP_DIM), jnp.float32)
    w = jax.random.normal(kw, (CLIP_DIM, OUT_DIM), jnp.float32) / math.sqrt(CLIP_DIM)
    bias = 0.1 * jax.random.normal(kb, (OUT_DIM,), jnp.float32)
    gamma = 1.0 + 0.1 * jax.random.normal(kg, (CROSS_DIM,), jnp.float32)
    beta = 0.1 * jax.random.normal(kbt, (CROSS_DIM,), jnp.float32)

    proj = make_image_proj(w, bias, gamma, beta)

    # small batch -> grid-free path
    out = jax.block_until_ready(proj(image_embeds))
    ref = reference(image_embeds, w, bias, gamma, beta)
    assert out.shape == (B, TOKENS, CROSS_DIM)
    assert jnp.allclose(out, ref, atol=2e-4, rtol=2e-4), "mismatch vs JAX reference (small batch)"

    # larger batch -> parallel batch-grid path
    big = jnp.tile(image_embeds, (4, 1))                 # (4*B, CLIP_DIM)
    out_big = jax.block_until_ready(proj(big))
    ref_big = reference(big, w, bias, gamma, beta)
    assert jnp.allclose(out_big, ref_big, atol=2e-4, rtol=2e-4), "mismatch vs JAX reference (big batch)"

    print("KERNEL_OK")
</pallas_src>

<mosaic_0001>
module attributes {stable_mosaic.version = 11 : i64} {
  func.func @image_proj_kernel(%arg0: memref<8x32xf32, #tpu.memory_space<vmem>>, %arg1: memref<32x256xf32, #tpu.memory_space<vmem>>, %arg2: memref<2x256xf32, #tpu.memory_space<vmem>>, %arg3: memref<128x128xbf16, #tpu.memory_space<vmem>>, %arg4: memref<8x128xf32, #tpu.memory_space<vmem>>) attributes {dimension_semantics = [], scalar_prefetch = 0 : i64, scratch_operands = 0 : i64, tpu.core_type = #tpu.core_type<tc>} {
    %c0 = arith.constant 0 : index
    %c0_0 = arith.constant 0 : index
    %0 = vector.load %arg0[%c0, %c0_0] : memref<8x32xf32, #tpu.memory_space<vmem>>, vector<8x32xf32>
    %c0_1 = arith.constant 0 : index
    %c0_2 = arith.constant 0 : index
    %1 = vector.load %arg1[%c0_1, %c0_2] : memref<32x256xf32, #tpu.memory_space<vmem>>, vector<32x256xf32>
    %cst = arith.constant dense<0.000000e+00> : vector<8x256xf32>
    %2 = tpu.matmul %0, %1, %cst {dimension_numbers = #tpu.dot_dimension_numbers<[1], [0], [0], [1], [0, 0, 1, 1], [], []>, precision = #tpu.contract_precision<fp32>} : vector<8x32xf32>, vector<32x256xf32>, vector<8x256xf32> -> vector<8x256xf32>
    %c0_3 = arith.constant 0 : index
    %c0_4 = arith.constant 0 : index
    %3 = vector.load %arg2[%c0_3, %c0_4] : memref<2x256xf32, #tpu.memory_space<vmem>>, vector<1x256xf32>
    %4 = vector.broadcast %3 : vector<1x256xf32> to vector<8x256xf32>
    %5 = arith.addf %2, %4 : vector<8x256xf32>
    %6 = vector.extract_strided_slice %5 {offsets = [0, 0], sizes = [8, 128], strides = [1, 1]} : vector<8x256xf32> to vector<8x128xf32>
    %7 = vector.extract_strided_slice %5 {offsets = [0, 128], sizes = [8, 128], strides = [1, 1]} : vector<8x256xf32> to vector<8x128xf32>
    %8 = arith.subf %6, %7 : vector<8x128xf32>
    %c0_5 = arith.constant 0 : index
    %c0_6 = arith.constant 0 : index
    %9 = vector.load %arg3[%c0_5, %c0_6] : memref<128x128xbf16, #tpu.memory_space<vmem>>, vector<128x128xbf16>
    %10 = arith.extf %9 : vector<128x128xbf16> to vector<128x128xf32>
    %11 = arith.mulf %8, %8 : vector<8x128xf32>
    %cst_7 = arith.constant dense<0.000000e+00> : vector<8x128xf32>
    %12 = tpu.matmul %11, %10, %cst_7 {dimension_numbers = #tpu.dot_dimension_numbers<[1], [0], [0], [1], [0, 0, 1, 1], [], []>, precision = #tpu.contract_precision<fp32>} : vector<8x128xf32>, vector<128x128xf32>, vector<8x128xf32> -> vector<8x128xf32>
    %cst_8 = arith.constant 9.99999974E-6 : f32
    %13 = vector.broadcast %cst_8 : f32 to vector<8x128xf32>
    %14 = arith.addf %12, %13 : vector<8x128xf32>
    %15 = math.rsqrt %14 : vector<8x128xf32>
    %16 = arith.mulf %8, %15 : vector<8x128xf32>
    %c1 = arith.constant 1 : index
    %c0_9 = arith.constant 0 : index
    %17 = vector.load %arg2[%c1, %c0_9] : memref<2x256xf32, #tpu.memory_space<vmem>>, vector<1x128xf32>
    %c1_10 = arith.constant 1 : index
    %c128 = arith.constant 128 : index
    %18 = vector.load %arg2[%c1_10, %c128] : memref<2x256xf32, #tpu.memory_space<vmem>>, vector<1x128xf32>
    %19 = vector.broadcast %17 : vector<1x128xf32> to vector<8x128xf32>
    %20 = arith.mulf %16, %19 : vector<8x128xf32>
    %21 = vector.broadcast %18 : vector<1x128xf32> to vector<8x128xf32>
    %22 = arith.addf %20, %21 : vector<8x128xf32>
    %c0_11 = arith.constant 0 : index
    %c0_12 = arith.constant 0 : index
    %23 = vector.load %arg4[%c0_11, %c0_12] : memref<8x128xf32, #tpu.memory_space<vmem>>, vector<8x128xf32>
    tpu.vector_store %arg4[%c0_11, %c0_12], %22 {strides = array<i32>} : memref<8x128xf32, #tpu.memory_space<vmem>>, vector<8x128xf32>,
    return
  }
}

</mosaic_0001>

<llo_original>
// kernel: run.1
$region0: #{run.1}
  #allocation0 [shape = 'u32[]', space=smem, size = 0x4, offset = 0x4, fixed_abs, tag = 'smem constant byte address 0x4 - core index']
  #allocation1 [shape = 'u32[72,128]{1,0:T(1,128)}', space=vmem, size = 0x9000, scoped, tag = 'internal scratch']
  %s0 = inlined_call_operand.hbm [shape: f32[8,32], index: 0, kind: input, shape index: {}]
  %s1 = inlined_call_operand.hbm [shape: f32[32,256], index: 1, kind: input, shape index: {}]
  %s2 = inlined_call_operand.hbm [shape: f32[2,256], index: 2, kind: input, shape index: {}]
  %s3 = inlined_call_operand.hbm [shape: bf16[128,128], index: 3, kind: input, shape index: {}]
  %s4 = inlined_call_operand.vmem [shape: f32[8,128], index: 4, kind: output, shape index: {}]
  %s5 = sld [smem:[#allocation0]]
  $region42: #{run.1} parent=0
    _
  %s7 = ssub.s32 1, %s5
  %s8 = scalar_select 0, %s7, %s5
  $region1: #{run.1} parent=0
    #allocation2 [shape = 'u8[4096]{0}', space=vmem, size = 0x1000, scoped, tag = 'input window, operand 0, single buffered']
    #allocation3 [shape = 's32[1]{0}', space=sflag, size = 0x4, scoped, tag = 'scoped memory for run.1']
    #allocation4 [shape = 'u8[32768]{0}', space=vmem, size = 0x8000, scoped, tag = 'input window, operand 1, single buffered']
    #allocation5 [shape = 's32[1]{0}', space=sflag, size = 0x4, scoped, tag = 'scoped memory for run.1']
    #allocation6 [shape = 'u8[2048]{0}', space=vmem, size = 0x800, scoped, tag = 'input window, operand 2, single buffered']
    #allocation7 [shape = 'u8[32768]{0}', space=vmem, size = 0x8000, scoped, tag = 'input window, operand 3, single buffered']
    #allocation8 [shape = 's32[1]{0}', space=sflag, size = 0x4, scoped, tag = 'scoped memory for run.1']
    %9 = vsyncpa [#allocation3], 0
    %10 = vsyncpa [#allocation5], 0
    %11 = vsyncpa [#allocation8], 0
    // Predicated region
    $region2: #{run.1} parent=1 // pred_check
      _
    $region3: #{run.1} parent=1 // pred_check_branch
      %13 = sbr.rel (0) target = $region5
    $region4: #{run.1} parent=1 // pred_region
      %15 = vsyncadd [#allocation3], 0
      %s17 = sshll.u32 %s0, 4
      %s18 = int_to_ptr.hbm [resolvable:$true] %s17
      %s19 = sshll.u32 [#allocation2], 4
      %s20 = int_to_ptr.vmem [resolvable:$true] %s19
      %22 = dma.hbm_to_vmem [thread:$0]  %s18, 128, %s20, [#allocation3]
    $region5: #{run.1} parent=1 // pred_fallthru
      _
    // Predicated region
    $region6: #{run.1} parent=1 // pred_check
      _
    $region7: #{run.1} parent=1 // pred_check_branch
      %24 = sbr.rel (0) target = $region9
    $region8: #{run.1} parent=1 // pred_region
      %26 = vsyncadd [#allocation5], 0
      %s27 = sshll.u32 %s1, 4
      %s28 = int_to_ptr.hbm [resolvable:$true] %s27
      %s29 = sshll.u32 [#allocation4], 4
      %s30 = int_to_ptr.vmem [resolvable:$true] %s29
      %35 = dma.hbm_to_vmem [thread:$0]  %s28, 1024, %s30, [#allocation5], 256, 256, 16
    $region9: #{run.1} parent=1 // pred_fallthru
      _
    // Predicated region
    $region10: #{run.1} parent=1 // pred_check
      _
    $region11: #{run.1} parent=1 // pred_check_branch
      %37 = sbr.rel (0) target = $region13
    $region12: #{run.1} parent=1 // pred_region
      %39 = vsyncadd [#allocation5], 0
      %s41 = sshll.u32 %s2, 4
      %s42 = int_to_ptr.hbm [resolvable:$true] %s41
      %s43 = sshll.u32 [#allocation6], 4
      %s44 = int_to_ptr.vmem [resolvable:$true] %s43
      %46 = dma.hbm_to_vmem [thread:$0]  %s42, 64, %s44, [#allocation5]
    $region13: #{run.1} parent=1 // pred_fallthru
      _
    // Predicated region
    $region14: #{run.1} parent=1 // pred_check
      _
    $region15: #{run.1} parent=1 // pred_check_branch
      %48 = sbr.rel (0) target = $region17
    $region16: #{run.1} parent=1 // pred_region
      %50 = vsyncadd [#allocation8], 0
      %s51 = sshll.u32 %s3, 4
      %s52 = int_to_ptr.hbm [resolvable:$true] %s51
      %s53 = sshll.u32 [#allocation7], 4
      %s54 = int_to_ptr.vmem [resolvable:$true] %s53
      %59 = dma.hbm_to_vmem [thread:$0]  %s52, 1024, %s54, [#allocation8], 64, 64, 4
    $region17: #{run.1} parent=1 // pred_fallthru
      _
    // Predicated region
    $region18: #{run.1} parent=1 // pred_check
      _
    $region19: #{run.1} parent=1 // pred_check_branch
      %61 = sbr.rel (0) target = $region21
    $region20: #{run.1} parent=1 // pred_region
      %63 = dma.done [#allocation3], 128
    $region21: #{run.1} parent=1 // pred_fallthru
      _
    // Predicated region
    $region22: #{run.1} parent=1 // pred_check
      _
    $region23: #{run.1} parent=1 // pred_check_branch
      %65 = sbr.rel (0) target = $region25
    $region24: #{run.1} parent=1 // pred_region
      %67 = dma.done [#allocation5], 1024
    $region25: #{run.1} parent=1 // pred_fallthru
      _
    // Predicated region
    $region26: #{run.1} parent=1 // pred_check
      _
    $region27: #{run.1} parent=1 // pred_check_branch
      %69 = sbr.rel (0) target = $region29
    $region28: #{run.1} parent=1 // pred_region
      %71 = dma.done [#allocation5], 64
    $region29: #{run.1} parent=1 // pred_fallthru
      _
    // Predicated region
    $region30: #{run.1} parent=1 // pred_check
      _
    $region31: #{run.1} parent=1 // pred_check_branch
      %73 = sbr.rel (0) target = $region33
    $region32: #{run.1} parent=1 // pred_region
      %75 = dma.done [#allocation8], 1024
    $region33: #{run.1} parent=1 // pred_fallthru
      _
    %v76 = vld [vmem:[#allocation2] sm:$0xff]
    %v77 = vld [vmem:[#allocation4] sm:$0xff]
    %v78 = vld [vmem:[#allocation4 + $0x8] sm:$0xff]
    %v79 = vld [vmem:[#allocation4 + $0x10] sm:$0xff]
    %v80 = vld [vmem:[#allocation4 + $0x18] sm:$0xff]
    %v81 = vld [vmem:[#allocation4 + $0x20] sm:$0xff]
    %v82 = vld [vmem:[#allocation4 + $0x28] sm:$0xff]
    %v83 = vld [vmem:[#allocation4 + $0x30] sm:$0xff]
    %v84 = vld [vmem:[#allocation4 + $0x38] sm:$0xff]
    %v85 = vld [vmem:[#allocation6] ss:$2 sm:$0x3]
    %v87 = vperm.slane %v85, 0
    %v88 = vperm.slane %v85, 1
    %vm91 = vcmask 261120
    %v93 = vsel %vm91, %v76, 0
    %95 = vmatpush.msra.mxu0 0.0
    %96 = vmatpush.msra.mxu0 0.0
    %97 = vmatpush.msra.mxu0 0.0
    %98 = vmatpush.msra.mxu0 0.0
    %99 = vmatpush.msra.mxu0 0.0
    %100 = vmatpush.msra.mxu0 0.0
    %101 = vmatpush.msra.mxu0 0.0
    %102 = vmatpush.msra.mxu0 0.0
    %103 = vmatpush.msra.mxu0 0.0
    %104 = vmatpush.msra.mxu0 0.0
    %105 = vmatpush.msra.mxu0 0.0
    %106 = vmatpush.msra.mxu0 0.0
    %v107 = vand.u32 %v83, 4294901760
    %108 = vmatpush.msra.mxu0 %v107
    %v109 = vand.u32 %v81, 4294901760
    %110 = vmatpush.msra.mxu0 %v109
    %v111 = vand.u32 %v79, 4294901760
    %112 = vmatpush.msra.mxu0 %v111
    %v113 = vand.u32 %v77, 4294901760
    %114 = vmatpush.msra.mxu0 %v113
    %v115 = vand.u32 %v93, 4294901760
    %v116 = vsub.f32 %v93, %v115
    %v117 = vand.u32 %v116, 4294901760
    %v118 = vsub.f32 %v116, %v117
    %v119 = vand.u32 %v118, 4294901760
    %120 = vmatmul.f32.gmra.mxu0 %v119
    %v121 = vpop.f32.mrf.mxu0
    %v122 = vadd.f32 %v87, %v121
    %123 = vdwg.mxu0
    %124 = vmatpush.msra.mxu0 0.0
    %125 = vmatpush.msra.mxu0 0.0
    %126 = vmatpush.msra.mxu0 0.0
    %127 = vmatpush.msra.mxu0 0.0
    %128 = vmatpush.msra.mxu0 0.0
    %129 = vmatpush.msra.mxu0 0.0
    %130 = vmatpush.msra.mxu0 0.0
    %131 = vmatpush.msra.mxu0 0.0
    %132 = vmatpush.msra.mxu0 0.0
    %133 = vmatpush.msra.mxu0 0.0
    %134 = vmatpush.msra.mxu0 0.0
    %135 = vmatpush.msra.mxu0 0.0
    %v136 = vand.u32 %v83, 4294901760
    %v137 = vsub.f32 %v83, %v136
    %v138 = vand.u32 %v137, 4294901760
    %v139 = vsub.f32 %v137, %v138
    %v140 = vand.u32 %v139, 4294901760
    %141 = vmatpush.msra.mxu0 %v140
    %v142 = vand.u32 %v81, 4294901760
    %v143 = vsub.f32 %v81, %v142
    %v144 = vand.u32 %v143, 4294901760
    %v145 = vsub.f32 %v143, %v144
    %v146 = vand.u32 %v145, 4294901760
    %147 = vmatpush.msra.mxu0 %v146
    %v148 = vand.u32 %v79, 4294901760
    %v149 = vsub.f32 %v79, %v148
    %v150 = vand.u32 %v149, 4294901760
    %v151 = vsub.f32 %v149, %v150
    %v152 = vand.u32 %v151, 4294901760
    %153 = vmatpush.msra.mxu0 %v152
    %v154 = vand.u32 %v77, 4294901760
    %v155 = vsub.f32 %v77, %v154
    %v156 = vand.u32 %v155, 4294901760
    %v157 = vsub.f32 %v155, %v156
    %v158 = vand.u32 %v157, 4294901760
    %159 = vmatpush.msra.mxu0 %v158
    %v160 = vand.u32 %v93, 4294901760
    %161 = vmatmul.f32.gmra.mxu0 %v160
    %v162 = vpop.f32.mrf.mxu0
    %v163 = vadd.f32 %v122, %v162
    %164 = vdwg.mxu0
    %165 = vmatpush.msra.mxu0 0.0
    %166 = vmatpush.msra.mxu0 0.0
    %167 = vmatpush.msra.mxu0 0.0
    %168 = vmatpush.msra.mxu0 0.0
    %169 = vmatpush.msra.mxu0 0.0
    %170 = vmatpush.msra.mxu0 0.0
    %171 = vmatpush.msra.mxu0 0.0
    %172 = vmatpush.msra.mxu0 0.0
    %173 = vmatpush.msra.mxu0 0.0
    %174 = vmatpush.msra.mxu0 0.0
    %175 = vmatpush.msra.mxu0 0.0
    %176 = vmatpush.msra.mxu0 0.0
    %v177 = vand.u32 %v83, 4294901760
    %v178 = vsub.f32 %v83, %v177
    %179 = vmatpush.msra.mxu0 %v178
    %v180 = vand.u32 %v81, 4294901760
    %v181 = vsub.f32 %v81, %v180
    %182 = vmatpush.msra.mxu0 %v181
    %v183 = vand.u32 %v79, 4294901760
    %v184 = vsub.f32 %v79, %v183
    %185 = vmatpush.msra.mxu0 %v184
    %v186 = vand.u32 %v77, 4294901760
    %v187 = vsub.f32 %v77, %v186
    %188 = vmatpush.msra.mxu0 %v187
    %v189 = vand.u32 %v93, 4294901760
    %v190 = vsub.f32 %v93, %v189
    %191 = vmatmul.f32.gmra.mxu0 %v190
    %v192 = vpop.f32.mrf.mxu0
    %v193 = vadd.f32 %v163, %v192
    %194 = vdwg.mxu0
    %195 = vmatpush.msra.mxu0 0.0
    %196 = vmatpush.msra.mxu0 0.0
    %197 = vmatpush.msra.mxu0 0.0
    %198 = vmatpush.msra.mxu0 0.0
    %199 = vmatpush.msra.mxu0 0.0
    %200 = vmatpush.msra.mxu0 0.0
    %201 = vmatpush.msra.mxu0 0.0
    %202 = vmatpush.msra.mxu0 0.0
    %203 = vmatpush.msra.mxu0 0.0
    %204 = vmatpush.msra.mxu0 0.0
    %205 = vmatpush.msra.mxu0 0.0
    %206 = vmatpush.msra.mxu0 0.0
    %v207 = vand.u32 %v83, 4294901760
    %208 = vmatpush.msra.mxu0 %v207
    %v209 = vand.u32 %v81, 4294901760
    %210 = vmatpush.msra.mxu0 %v209
    %v211 = vand.u32 %v79, 4294901760
    %212 = vmatpush.msra.mxu0 %v211
    %v213 = vand.u32 %v77, 4294901760
    %214 = vmatpush.msra.mxu0 %v213
    %v215 = vand.u32 %v93, 4294901760
    %v216 = vsub.f32 %v93, %v215
    %v217 = vand.u32 %v216, 4294901760
    %218 = vmatmul.f32.gmra.mxu0 %v217
    %v219 = vpop.f32.mrf.mxu0
    %v220 = vadd.f32 %v193, %v219
    %221 = vdwg.mxu0
    %222 = vmatpush.msra.mxu0 0.0
    %223 = vmatpush.msra.mxu0 0.0
    %224 = vmatpush.msra.mxu0 0.0
    %225 = vmatpush.msra.mxu0 0.0
    %226 = vmatpush.msra.mxu0 0.0
    %227 = vmatpush.msra.mxu0 0.0
    %228 = vmatpush.msra.mxu0 0.0
    %229 = vmatpush.msra.mxu0 0.0
    %230 = vmatpush.msra.mxu0 0.0
    %231 = vmatpush.msra.mxu0 0.0
    %232 = vmatpush.msra.mxu0 0.0
    %233 = vmatpush.msra.mxu0 0.0
    %v234 = vand.u32 %v83, 4294901760
    %v235 = vsub.f32 %v83, %v234
    %v236 = vand.u32 %v235, 4294901760
    %237 = vmatpush.msra.mxu0 %v236
    %v238 = vand.u32 %v81, 4294901760
    %v239 = vsub.f32 %v81, %v238
    %v240 = vand.u32 %v239, 4294901760
    %241 = vmatpush.msra.mxu0 %v240
    %v242 = vand.u32 %v79, 4294901760
    %v243 = vsub.f32 %v79, %v242
    %v244 = vand.u32 %v243, 4294901760
    %245 = vmatpush.msra.mxu0 %v244
    %v246 = vand.u32 %v77, 4294901760
    %v247 = vsub.f32 %v77, %v246
    %v248 = vand.u32 %v247, 4294901760
    %249 = vmatpush.msra.mxu0 %v248
    %v250 = vand.u32 %v93, 4294901760
    %251 = vmatmul.f32.gmra.mxu0 %v250
    %v252 = vpop.f32.mrf.mxu0
    %v253 = vadd.f32 %v220, %v252
    %254 = vdwg.mxu0
    %255 = vmatpush.msra.mxu0 0.0
    %256 = vmatpush.msra.mxu0 0.0
    %257 = vmatpush.msra.mxu0 0.0
    %258 = vmatpush.msra.mxu0 0.0
    %259 = vmatpush.msra.mxu0 0.0
    %260 = vmatpush.msra.mxu0 0.0
    %261 = vmatpush.msra.mxu0 0.0
    %262 = vmatpush.msra.mxu0 0.0
    %263 = vmatpush.msra.mxu0 0.0
    %264 = vmatpush.msra.mxu0 0.0
    %265 = vmatpush.msra.mxu0 0.0
    %266 = vmatpush.msra.mxu0 0.0
    %v267 = vand.u32 %v83, 4294901760
    %268 = vmatpush.msra.mxu0 %v267
    %v269 = vand.u32 %v81, 4294901760
    %270 = vmatpush.msra.mxu0 %v269
    %v271 = vand.u32 %v79, 4294901760
    %272 = vmatpush.msra.mxu0 %v271
    %v273 = vand.u32 %v77, 4294901760
    %274 = vmatpush.msra.mxu0 %v273
    %v275 = vand.u32 %v93, 4294901760
    %276 = vmatmul.f32.gmra.mxu0 %v275
    %v277 = vpop.f32.mrf.mxu0
    %v278 = vadd.f32 %v253, %v277
    %279 = vdwg.mxu0
    %280 = vmatpush.msra.mxu0 0.0
    %281 = vmatpush.msra.mxu0 0.0
    %282 = vmatpush.msra.mxu0 0.0
    %283 = vmatpush.msra.mxu0 0.0
    %284 = vmatpush.msra.mxu0 0.0
    %285 = vmatpush.msra.mxu0 0.0
    %286 = vmatpush.msra.mxu0 0.0
    %287 = vmatpush.msra.mxu0 0.0
    %288 = vmatpush.msra.mxu0 0.0
    %289 = vmatpush.msra.mxu0 0.0
    %290 = vmatpush.msra.mxu0 0.0
    %291 = vmatpush.msra.mxu0 0.0
    %v292 = vand.u32 %v84, 4294901760
    %293 = vmatpush.msra.mxu0 %v292
    %v294 = vand.u32 %v82, 4294901760
    %295 = vmatpush.msra.mxu0 %v294
    %v296 = vand.u32 %v80, 4294901760
    %297 = vmatpush.msra.mxu0 %v296
    %v298 = vand.u32 %v78, 4294901760
    %299 = vmatpush.msra.mxu0 %v298
    %v300 = vand.u32 %v93, 4294901760
    %v301 = vsub.f32 %v93, %v300
    %v302 = vand.u32 %v301, 4294901760
    %v303 = vsub.f32 %v301, %v302
    %v304 = vand.u32 %v303, 4294901760
    %305 = vmatmul.f32.gmra.mxu0 %v304
    %v306 = vpop.f32.mrf.mxu0
    %v307 = vadd.f32 %v88, %v306
    %308 = vdwg.mxu0
    %309 = vmatpush.msra.mxu0 0.0
    %310 = vmatpush.msra.mxu0 0.0
    %311 = vmatpush.msra.mxu0 0.0
    %312 = vmatpush.msra.mxu0 0.0
    %313 = vmatpush.msra.mxu0 0.0
    %314 = vmatpush.msra.mxu0 0.0
    %315 = vmatpush.msra.mxu0 0.0
    %316 = vmatpush.msra.mxu0 0.0
    %317 = vmatpush.msra.mxu0 0.0
    %318 = vmatpush.msra.mxu0 0.0
    %319 = vmatpush.msra.mxu0 0.0
    %320 = vmatpush.msra.mxu0 0.0
    %v321 = vand.u32 %v84, 4294901760
    %v322 = vsub.f32 %v84, %v321
    %v323 = vand.u32 %v322, 4294901760
    %v324 = vsub.f32 %v322, %v323
    %v325 = vand.u32 %v324, 4294901760
    %326 = vmatpush.msra.mxu0 %v325
    %v327 = vand.u32 %v82, 4294901760
    %v328 = vsub.f32 %v82, %v327
    %v329 = vand.u32 %v328, 4294901760
    %v330 = vsub.f32 %v328, %v329
    %v331 = vand.u32 %v330, 4294901760
    %332 = vmatpush.msra.mxu0 %v331
    %v333 = vand.u32 %v80, 4294901760
    %v334 = vsub.f32 %v80, %v333
    %v335 = vand.u32 %v334, 4294901760
    %v336 = vsub.f32 %v334, %v335
    %v337 = vand.u32 %v336, 4294901760
    %338 = vmatpush.msra.mxu0 %v337
    %v339 = vand.u32 %v78, 4294901760
    %v340 = vsub.f32 %v78, %v339
    %v341 = vand.u32 %v340, 4294901760
    %v342 = vsub.f32 %v340, %v341
    %v343 = vand.u32 %v342, 4294901760
    %344 = vmatpush.msra.mxu0 %v343
    %v345 = vand.u32 %v93, 4294901760
    %346 = vmatmul.f32.gmra.mxu0 %v345
    %v347 = vpop.f32.mrf.mxu0
    %v348 = vadd.f32 %v307, %v347
    %349 = vdwg.mxu0
    %350 = vmatpush.msra.mxu0 0.0
    %351 = vmatpush.msra.mxu0 0.0
    %352 = vmatpush.msra.mxu0 0.0
    %353 = vmatpush.msra.mxu0 0.0
    %354 = vmatpush.msra.mxu0 0.0
    %355 = vmatpush.msra.mxu0 0.0
    %356 = vmatpush.msra.mxu0 0.0
    %357 = vmatpush.msra.mxu0 0.0
    %358 = vmatpush.msra.mxu0 0.0
    %359 = vmatpush.msra.mxu0 0.0
    %360 = vmatpush.msra.mxu0 0.0
    %361 = vmatpush.msra.mxu0 0.0
    %v362 = vand.u32 %v84, 4294901760
    %v363 = vsub.f32 %v84, %v362
    %364 = vmatpush.msra.mxu0 %v363
    %v365 = vand.u32 %v82, 4294901760
    %v366 = vsub.f32 %v82, %v365
    %367 = vmatpush.msra.mxu0 %v366
    %v368 = vand.u32 %v80, 4294901760
    %v369 = vsub.f32 %v80, %v368
    %370 = vmatpush.msra.mxu0 %v369
    %v371 = vand.u32 %v78, 4294901760
    %v372 = vsub.f32 %v78, %v371
    %373 = vmatpush.msra.mxu0 %v372
    %v374 = vand.u32 %v93, 4294901760
    %v375 = vsub.f32 %v93, %v374
    %376 = vmatmul.f32.gmra.mxu0 %v375
    %v377 = vpop.f32.mrf.mxu0
    %v378 = vadd.f32 %v348, %v377
    %379 = vdwg.mxu0
    %380 = vmatpush.msra.mxu0 0.0
    %381 = vmatpush.msra.mxu0 0.0
    %382 = vmatpush.msra.mxu0 0.0
    %383 = vmatpush.msra.mxu0 0.0
    %384 = vmatpush.msra.mxu0 0.0
    %385 = vmatpush.msra.mxu0 0.0
    %386 = vmatpush.msra.mxu0 0.0
    %387 = vmatpush.msra.mxu0 0.0
    %388 = vmatpush.msra.mxu0 0.0
    %389 = vmatpush.msra.mxu0 0.0
    %390 = vmatpush.msra.mxu0 0.0
    %391 = vmatpush.msra.mxu0 0.0
    %v392 = vand.u32 %v84, 4294901760
    %393 = vmatpush.msra.mxu0 %v392
    %v394 = vand.u32 %v82, 4294901760
    %395 = vmatpush.msra.mxu0 %v394
    %v396 = vand.u32 %v80, 4294901760
    %397 = vmatpush.msra.mxu0 %v396
    %v398 = vand.u32 %v78, 4294901760
    %399 = vmatpush.msra.mxu0 %v398
    %v400 = vand.u32 %v93, 4294901760
    %v401 = vsub.f32 %v93, %v400
    %v402 = vand.u32 %v401, 4294901760
    %403 = vmatmul.f32.gmra.mxu0 %v402
    %v404 = vpop.f32.mrf.mxu0
    %v405 = vadd.f32 %v378, %v404
    %406 = vdwg.mxu0
    %407 = vmatpush.msra.mxu0 0.0
    %408 = vmatpush.msra.mxu0 0.0
    %409 = vmatpush.msra.mxu0 0.0
    %410 = vmatpush.msra.mxu0 0.0
    %411 = vmatpush.msra.mxu0 0.0
    %412 = vmatpush.msra.mxu0 0.0
    %413 = vmatpush.msra.mxu0 0.0
    %414 = vmatpush.msra.mxu0 0.0
    %415 = vmatpush.msra.mxu0 0.0
    %416 = vmatpush.msra.mxu0 0.0
    %417 = vmatpush.msra.mxu0 0.0
    %418 = vmatpush.msra.mxu0 0.0
    %v419 = vand.u32 %v84, 4294901760
    %v420 = vsub.f32 %v84, %v419
    %v421 = vand.u32 %v420, 4294901760
    %422 = vmatpush.msra.mxu0 %v421
    %v423 = vand.u32 %v82, 4294901760
    %v424 = vsub.f32 %v82, %v423
    %v425 = vand.u32 %v424, 4294901760
    %426 = vmatpush.msra.mxu0 %v425
    %v427 = vand.u32 %v80, 4294901760
    %v428 = vsub.f32 %v80, %v427
    %v429 = vand.u32 %v428, 4294901760
    %430 = vmatpush.msra.mxu0 %v429
    %v431 = vand.u32 %v78, 4294901760
    %v432 = vsub.f32 %v78, %v431
    %v433 = vand.u32 %v432, 4294901760
    %434 = vmatpush.msra.mxu0 %v433
    %v435 = vand.u32 %v93, 4294901760
    %436 = vmatmul.f32.gmra.mxu0 %v435
    %v437 = vpop.f32.mrf.mxu0
    %v438 = vadd.f32 %v405, %v437
    %439 = vdwg.mxu0
    %440 = vmatpush.msra.mxu0 0.0
    %441 = vmatpush.msra.mxu0 0.0
    %442 = vmatpush.msra.mxu0 0.0
    %443 = vmatpush.msra.mxu0 0.0
    %444 = vmatpush.msra.mxu0 0.0
    %445 = vmatpush.msra.mxu0 0.0
    %446 = vmatpush.msra.mxu0 0.0
    %447 = vmatpush.msra.mxu0 0.0
    %448 = vmatpush.msra.mxu0 0.0
    %449 = vmatpush.msra.mxu0 0.0
    %450 = vmatpush.msra.mxu0 0.0
    %451 = vmatpush.msra.mxu0 0.0
    %v452 = vand.u32 %v84, 4294901760
    %453 = vmatpush.msra.mxu0 %v452
    %v454 = vand.u32 %v82, 4294901760
    %455 = vmatpush.msra.mxu0 %v454
    %v456 = vand.u32 %v80, 4294901760
    %457 = vmatpush.msra.mxu0 %v456
    %v458 = vand.u32 %v78, 4294901760
    %459 = vmatpush.msra.mxu0 %v458
    %v460 = vand.u32 %v93, 4294901760
    %461 = vmatmul.f32.gmra.mxu0 %v460
    %v462 = vpop.f32.mrf.mxu0
    %v463 = vadd.f32 %v438, %v462
    %464 = vdwg.mxu0
    %v465 = vsub.f32 %v278, %v463
    %v466 = vld [vmem:[#allocation7] sm:$0xf]
    %v467 = vld [vmem:[#allocation7 + $0x4] sm:$0xf]
    %v468 = vld [vmem:[#allocation7 + $0x8] sm:$0xf]
    %v469 = vld [vmem:[#allocation7 + $0xc] sm:$0xf]
    %v470 = vld [vmem:[#allocation7 + $0x10] sm:$0xf]
    %v471 = vld [vmem:[#allocation7 + $0x14] sm:$0xf]
    %v472 = vld [vmem:[#allocation7 + $0x18] sm:$0xf]
    %v473 = vld [vmem:[#allocation7 + $0x1c] sm:$0xf]
    %v474 = vld [vmem:[#allocation7 + $0x20] sm:$0xf]
    %v475 = vld [vmem:[#allocation7 + $0x24] sm:$0xf]
    %v476 = vld [vmem:[#allocation7 + $0x28] sm:$0xf]
    %v477 = vld [vmem:[#allocation7 + $0x2c] sm:$0xf]
    %v478 = vld [vmem:[#allocation7 + $0x30] sm:$0xf]
    %v479 = vld [vmem:[#allocation7 + $0x34] sm:$0xf]
    %v480 = vld [vmem:[#allocation7 + $0x38] sm:$0xf]
    %v481 = vld [vmem:[#allocation7 + $0x3c] sm:$0xf]
    %v482 = vunpack.c.l.bf16 %v466
    %v483 = vunpack.c.l.bf16 %v467
    %v484 = vunpack.c.l.bf16 %v468
    %v485 = vunpack.c.l.bf16 %v469
    %v486 = vunpack.c.l.bf16 %v470
    %v487 = vunpack.c.l.bf16 %v471
    %v488 = vunpack.c.l.bf16 %v472
    %v489 = vunpack.c.l.bf16 %v473
    %v490 = vunpack.c.l.bf16 %v474
    %v491 = vunpack.c.l.bf16 %v475
    %v492 = vunpack.c.l.bf16 %v476
    %v493 = vunpack.c.l.bf16 %v477
    %v494 = vunpack.c.l.bf16 %v478
    %v495 = vunpack.c.l.bf16 %v479
    %v496 = vunpack.c.l.bf16 %v480
    %v497 = vunpack.c.l.bf16 %v481
    %v498 = vmul.f32 %v465, %v465
    %499 = vmatpush.msra.mxu0 %v497
    %500 = vmatpush.msra.mxu0 %v496
    %501 = vmatpush.msra.mxu0 %v495
    %502 = vmatpush.msra.mxu0 %v494
    %503 = vmatpush.msra.mxu0 %v493
    %504 = vmatpush.msra.mxu0 %v492
    %505 = vmatpush.msra.mxu0 %v491
    %506 = vmatpush.msra.mxu0 %v490
    %507 = vmatpush.msra.mxu0 %v489
    %508 = vmatpush.msra.mxu0 %v488
    %509 = vmatpush.msra.mxu0 %v487
    %510 = vmatpush.msra.mxu0 %v486
    %511 = vmatpush.msra.mxu0 %v485
    %512 = vmatpush.msra.mxu0 %v484
    %513 = vmatpush.msra.mxu0 %v483
    %514 = vmatpush.msra.mxu0 %v482
    %v515 = vand.u32 %v498, 4294901760
    %v516 = vsub.f32 %v498, %v515
    %v517 = vand.u32 %v516, 4294901760
    %v518 = vsub.f32 %v516, %v517
    %v519 = vand.u32 %v518, 4294901760
    %520 = vmatmul.f32.gmra.mxu0 %v519
    %v521 = vpop.f32.mrf.mxu0
    %v522 = vadd.f32 1e-05, %v521
    %523 = vdwg.mxu0
    %v524 = vsub.f32 %v497, %v497
    %v525 = vand.u32 %v524, 4294901760
    %v526 = vsub.f32 %v524, %v525
    %v527 = vand.u32 %v526, 4294901760
    %528 = vmatpush.msra.mxu0 %v527
    %v529 = vsub.f32 %v496, %v496
    %v530 = vand.u32 %v529, 4294901760
    %v531 = vsub.f32 %v529, %v530
    %v532 = vand.u32 %v531, 4294901760
    %533 = vmatpush.msra.mxu0 %v532
    %v534 = vsub.f32 %v495, %v495
    %v535 = vand.u32 %v534, 4294901760
    %v536 = vsub.f32 %v534, %v535
    %v537 = vand.u32 %v536, 4294901760
    %538 = vmatpush.msra.mxu0 %v537
    %v539 = vsub.f32 %v494, %v494
    %v540 = vand.u32 %v539, 4294901760
    %v541 = vsub.f32 %v539, %v540
    %v542 = vand.u32 %v541, 4294901760
    %543 = vmatpush.msra.mxu0 %v542
    %v544 = vsub.f32 %v493, %v493
    %v545 = vand.u32 %v544, 4294901760
    %v546 = vsub.f32 %v544, %v545
    %v547 = vand.u32 %v546, 4294901760
    %548 = vmatpush.msra.mxu0 %v547
    %v549 = vsub.f32 %v492, %v492
    %v550 = vand.u32 %v549, 4294901760
    %v551 = vsub.f32 %v549, %v550
    %v552 = vand.u32 %v551, 4294901760
    %553 = vmatpush.msra.mxu0 %v552
    %v554 = vsub.f32 %v491, %v491
    %v555 = vand.u32 %v554, 4294901760
    %v556 = vsub.f32 %v554, %v555
    %v557 = vand.u32 %v556, 4294901760
    %558 = vmatpush.msra.mxu0 %v557
    %v559 = vsub.f32 %v490, %v490
    %v560 = vand.u32 %v559, 4294901760
    %v561 = vsub.f32 %v559, %v560
    %v562 = vand.u32 %v561, 4294901760
    %563 = vmatpush.msra.mxu0 %v562
    %v564 = vsub.f32 %v489, %v489
    %v565 = vand.u32 %v564, 4294901760
    %v566 = vsub.f32 %v564, %v565
    %v567 = vand.u32 %v566, 4294901760
    %568 = vmatpush.msra.mxu0 %v567
    %v569 = vsub.f32 %v488, %v488
    %v570 = vand.u32 %v569, 4294901760
    %v571 = vsub.f32 %v569, %v570
    %v572 = vand.u32 %v571, 4294901760
    %573 = vmatpush.msra.mxu0 %v572
    %v574 = vsub.f32 %v487, %v487
    %v575 = vand.u32 %v574, 4294901760
    %v576 = vsub.f32 %v574, %v575
    %v577 = vand.u32 %v576, 4294901760
    %578 = vmatpush.msra.mxu0 %v577
    %v579 = vsub.f32 %v486, %v486
    %v580 = vand.u32 %v579, 4294901760
    %v581 = vsub.f32 %v579, %v580
    %v582 = vand.u32 %v581, 4294901760
    %583 = vmatpush.msra.mxu0 %v582
    %v584 = vsub.f32 %v485, %v485
    %v585 = vand.u32 %v584, 4294901760
    %v586 = vsub.f32 %v584, %v585
    %v587 = vand.u32 %v586, 4294901760
    %588 = vmatpush.msra.mxu0 %v587
    %v589 = vsub.f32 %v484, %v484
    %v590 = vand.u32 %v589, 4294901760
    %v591 = vsub.f32 %v589, %v590
    %v592 = vand.u32 %v591, 4294901760
    %593 = vmatpush.msra.mxu0 %v592
    %v594 = vsub.f32 %v483, %v483
    %v595 = vand.u32 %v594, 4294901760
    %v596 = vsub.f32 %v594, %v595
    %v597 = vand.u32 %v596, 4294901760
    %598 = vmatpush.msra.mxu0 %v597
    %v599 = vsub.f32 %v482, %v482
    %v600 = vand.u32 %v599, 4294901760
    %v601 = vsub.f32 %v599, %v600
    %v602 = vand.u32 %v601, 4294901760
    %603 = vmatpush.msra.mxu0 %v602
    %v604 = vand.u32 %v498, 4294901760
    %605 = vmatmul.f32.gmra.mxu0 %v604
    %v606 = vpop.f32.mrf.mxu0
    %v607 = vadd.f32 %v522, %v606
    %608 = vdwg.mxu0
    %v609 = vsub.f32 %v497, %v497
    %610 = vmatpush.msra.mxu0 %v609
    %v611 = vsub.f32 %v496, %v496
    %612 = vmatpush.msra.mxu0 %v611
    %v613 = vsub.f32 %v495, %v495
    %614 = vmatpush.msra.mxu0 %v613
    %v615 = vsub.f32 %v494, %v494
    %616 = vmatpush.msra.mxu0 %v615
    %v617 = vsub.f32 %v493, %v493
    %618 = vmatpush.msra.mxu0 %v617
    %v619 = vsub.f32 %v492, %v492
    %620 = vmatpush.msra.mxu0 %v619
    %v621 = vsub.f32 %v491, %v491
    %622 = vmatpush.msra.mxu0 %v621
    %v623 = vsub.f32 %v490, %v490
    %624 = vmatpush.msra.mxu0 %v623
    %v625 = vsub.f32 %v489, %v489
    %626 = vmatpush.msra.mxu0 %v625
    %v627 = vsub.f32 %v488, %v488
    %628 = vmatpush.msra.mxu0 %v627
    %v629 = vsub.f32 %v487, %v487
    %630 = vmatpush.msra.mxu0 %v629
    %v631 = vsub.f32 %v486, %v486
    %632 = vmatpush.msra.mxu0 %v631
    %v633 = vsub.f32 %v485, %v485
    %634 = vmatpush.msra.mxu0 %v633
    %v635 = vsub.f32 %v484, %v484
    %636 = vmatpush.msra.mxu0 %v635
    %v637 = vsub.f32 %v483, %v483
    %638 = vmatpush.msra.mxu0 %v637
    %v639 = vsub.f32 %v482, %v482
    %640 = vmatpush.msra.mxu0 %v639
    %v641 = vand.u32 %v498, 4294901760
    %v642 = vsub.f32 %v498, %v641
    %643 = vmatmul.f32.gmra.mxu0 %v642
    %v644 = vpop.f32.mrf.mxu0
    %v645 = vadd.f32 %v607, %v644
    %646 = vdwg.mxu0
    %647 = vmatpush.msra.mxu0 %v497
    %648 = vmatpush.msra.mxu0 %v496
    %649 = vmatpush.msra.mxu0 %v495
    %650 = vmatpush.msra.mxu0 %v494
    %651 = vmatpush.msra.mxu0 %v493
    %652 = vmatpush.msra.mxu0 %v492
    %653 = vmatpush.msra.mxu0 %v491
    %654 = vmatpush.msra.mxu0 %v490
    %655 = vmatpush.msra.mxu0 %v489
    %656 = vmatpush.msra.mxu0 %v488
    %657 = vmatpush.msra.mxu0 %v487
    %658 = vmatpush.msra.mxu0 %v486
    %659 = vmatpush.msra.mxu0 %v485
    %660 = vmatpush.msra.mxu0 %v484
    %661 = vmatpush.msra.mxu0 %v483
    %662 = vmatpush.msra.mxu0 %v482
    %v663 = vand.u32 %v498, 4294901760
    %v664 = vsub.f32 %v498, %v663
    %v665 = vand.u32 %v664, 4294901760
    %666 = vmatmul.f32.gmra.mxu0 %v665
    %v667 = vpop.f32.mrf.mxu0
    %v668 = vadd.f32 %v645, %v667
    %669 = vdwg.mxu0
    %v670 = vsub.f32 %v497, %v497
    %v671 = vand.u32 %v670, 4294901760
    %672 = vmatpush.msra.mxu0 %v671
    %v673 = vsub.f32 %v496, %v496
    %v674 = vand.u32 %v673, 4294901760
    %675 = vmatpush.msra.mxu0 %v674
    %v676 = vsub.f32 %v495, %v495
    %v677 = vand.u32 %v676, 4294901760
    %678 = vmatpush.msra.mxu0 %v677
    %v679 = vsub.f32 %v494, %v494
    %v680 = vand.u32 %v679, 4294901760
    %681 = vmatpush.msra.mxu0 %v680
    %v682 = vsub.f32 %v493, %v493
    %v683 = vand.u32 %v682, 4294901760
    %684 = vmatpush.msra.mxu0 %v683
    %v685 = vsub.f32 %v492, %v492
    %v686 = vand.u32 %v685, 4294901760
    %687 = vmatpush.msra.mxu0 %v686
    %v688 = vsub.f32 %v491, %v491
    %v689 = vand.u32 %v688, 4294901760
    %690 = vmatpush.msra.mxu0 %v689
    %v691 = vsub.f32 %v490, %v490
    %v692 = vand.u32 %v691, 4294901760
    %693 = vmatpush.msra.mxu0 %v692
    %v694 = vsub.f32 %v489, %v489
    %v695 = vand.u32 %v694, 4294901760
    %696 = vmatpush.msra.mxu0 %v695
    %v697 = vsub.f32 %v488, %v488
    %v698 = vand.u32 %v697, 4294901760
    %699 = vmatpush.msra.mxu0 %v698
    %v700 = vsub.f32 %v487, %v487
    %v701 = vand.u32 %v700, 4294901760
    %702 = vmatpush.msra.mxu0 %v701
    %v703 = vsub.f32 %v486, %v486
    %v704 = vand.u32 %v703, 4294901760
    %705 = vmatpush.msra.mxu0 %v704
    %v706 = vsub.f32 %v485, %v485
    %v707 = vand.u32 %v706, 4294901760
    %708 = vmatpush.msra.mxu0 %v707
    %v709 = vsub.f32 %v484, %v484
    %v710 = vand.u32 %v709, 4294901760
    %711 = vmatpush.msra.mxu0 %v710
    %v712 = vsub.f32 %v483, %v483
    %v713 = vand.u32 %v712, 4294901760
    %714 = vmatpush.msra.mxu0 %v713
    %v715 = vsub.f32 %v482, %v482
    %v716 = vand.u32 %v715, 4294901760
    %717 = vmatpush.msra.mxu0 %v716
    %v718 = vand.u32 %v498, 4294901760
    %719 = vmatmul.f32.gmra.mxu0 %v718
    %v720 = vpop.f32.mrf.mxu0
    %v721 = vadd.f32 %v668, %v720
    %722 = vdwg.mxu0
    %723 = vmatpush.msra.mxu0 %v497
    %724 = vmatpush.msra.mxu0 %v496
    %725 = vmatpush.msra.mxu0 %v495
    %726 = vmatpush.msra.mxu0 %v494
    %727 = vmatpush.msra.mxu0 %v493
    %728 = vmatpush.msra.mxu0 %v492
    %729 = vmatpush.msra.mxu0 %v491
    %730 = vmatpush.msra.mxu0 %v490
    %731 = vmatpush.msra.mxu0 %v489
    %732 = vmatpush.msra.mxu0 %v488
    %733 = vmatpush.msra.mxu0 %v487
    %734 = vmatpush.msra.mxu0 %v486
    %735 = vmatpush.msra.mxu0 %v485
    %736 = vmatpush.msra.mxu0 %v484
    %737 = vmatpush.msra.mxu0 %v483
    %738 = vmatpush.msra.mxu0 %v482
    %v739 = vand.u32 %v498, 4294901760
    %740 = vmatmul.f32.gmra.mxu0 %v739
    %v741 = vpop.f32.mrf.mxu0
    %v742 = vadd.f32 %v721, %v741
    %743 = vdwg.mxu0
    %v744 = vrsqrt.pop %v742
    %v745 = vmul.f32 %v744, %v742
    %v746 = vmul.f32 %v745, %v744
    %v747 = vmul.f32 0.5, %v746
    %v748 = vsub.f32 1.5, %v747
    %v749 = vmul.f32 %v744, %v748
    %vm750 = vweird.f32 %v742
    %vm751 = vweird.f32 %v744
    %vm752 = vmor %vm750, %vm751
    %v753 = vsel %vm752, %v744, %v749
    %v754 = vmul.f32 %v465, %v753
    %v755 = vld [vmem:[#allocation6 + $0x1] sm:$0x1]
    %v756 = vld [vmem:[#allocation6 + $0x3] sm:$0x1]
    %v757 = vperm.slane %v755, 0
    %v758 = vmul.f32 %v754, %v757
    %v759 = vperm.slane %v756, 0
    %v760 = vadd.f32 %v758, %v759
    %761 = vst [vmem:[%s4] sm:$0xff] %v760
    // Predicated region
    $region34: #{run.1} parent=1 // pred_check
      _
    $region35: #{run.1} parent=1 // pred_check_branch
      %763 = sbr.rel (0) target = $region37
    $region36: #{run.1} parent=1 // pred_region
      _
    $region37: #{run.1} parent=1 // pred_fallthru
      _
    // Predicated region
    $region38: #{run.1} parent=1 // pred_check
      _
    $region39: #{run.1} parent=1 // pred_check_branch
      %765 = sbr.rel (0) target = $region41
    $region40: #{run.1} parent=1 // pred_region
      _
    $region41: #{run.1} parent=1 // pred_fallthru
      _
    %766 = vsyncpa [#allocation3], 1
    %767 = vsyncpa [#allocation5], 1
    %768 = vsyncpa [#allocation8], 1

</llo_original>
